<compile_context>
chip_gen: v7x
topology: tpu7x:2x2x1
jax: 0.10.0
libtpu: 0.0.40
codegen_flags: <defaults>
</compile_context>

<pallas_src>
import functools

import jax
import jax.numpy as jnp
from jax.experimental import pallas as pl
from jax.experimental.pallas import tpu as pltpu

LANES = 128                               # lane width
SUBLANES = 8                              # f32 sublanes per vreg
BR_MAX = 4096                             # block rows -> 2 MiB per f32 input tile
SMALL_PATH_MAX_BYTES = 8 * 1024 * 1024    # total slab bytes for the fused single-block path


# ---------------------------------------------------------------------------
# Hardware probe: TensorCores per chip (2 on v7x). Best-effort, falls back to 1.
# ---------------------------------------------------------------------------
@functools.lru_cache(maxsize=None)
def _num_tensorcores() -> int:
    try:
        info = pltpu.get_tpu_info()
    except Exception:
        return 1
    for name in ("num_cores", "num_cores_per_chip", "core_count", "tensor_core_count"):
        v = getattr(info, name, None)
        if isinstance(v, int) and v >= 1:
            return max(1, min(int(v), 2))
    return 1


def _sublane_multiple(dtype) -> int:
    # f32 -> 8 rows, bf16/f16 -> 16, int8/fp8 -> 32 (sub-32-bit packs along sublanes)
    itemsize = jnp.dtype(dtype).itemsize
    return SUBLANES * max(1, 4 // itemsize)


def _to_slab(x, row_mult):
    """Flatten to a lane-dense (rows, 128) slab in the array's *native* dtype.

    Free reshape (no HBM copy) when the flat size is already aligned. The ragged
    fallback zero-pads; zero padding contributes 0 to both sum(ra^2) and the L1
    sum, so no masking of padded rows is ever required.
    """
    n = x.size
    rows = -(-n // LANES)
    if rows * LANES == n and rows % row_mult == 0:
        return x.reshape(rows, LANES)
    rows_p = -(-rows // row_mult) * row_mult
    flat = jnp.zeros((rows_p * LANES,), x.dtype).at[:n].set(x.reshape(-1))
    return flat.reshape(rows_p, LANES)


# ---------------------------------------------------------------------------
# Small-n path: whole problem is VMEM-resident -> fully fused single kernel.
# Output: one lane-dense (8,128) partial-sum block (final reduce in wrapper).
# ---------------------------------------------------------------------------
def _fused_small_kernel(sr_ref, hr_ref, ra_ref, nz_ref, o_ref, *, radius, sigma):
    sr = sr_ref[...].astype(jnp.float32)
    hr = hr_ref[...].astype(jnp.float32)
    ra = ra_ref[...].astype(jnp.float32)
    nz = nz_ref[...].astype(jnp.float32)

    inv = radius / jnp.sqrt(jnp.sum(ra * ra))          # zero padding contributes 0
    z = ra * inv + (nz * sigma if sigma != 1.0 else nz)
    diff = jnp.abs(hr - (sr + z))
    o_ref[...] = diff.reshape(-1, SUBLANES, LANES).sum(axis=0)


# ---------------------------------------------------------------------------
# Tiled streaming path: z_prime construction + L1 partial sums.
# radius/sqrt(sum(ra^2)) arrives via scalar prefetch (SMEM).
# ---------------------------------------------------------------------------
def _l1_tiled_kernel(inv_ref, sr_ref, hr_ref, ra_ref, nz_ref, o_ref, acc_ref, *,
                     br, valid_rows, blocks_per_core, sigma, has_partial, has_oob):
    i = pl.program_id(1)

    @pl.when(i == 0)
    def _init():
        acc_ref[...] = jnp.zeros_like(acc_ref)

    block_idx = pl.program_id(0) * blocks_per_core + i   # logical (un-clamped) block
    row_off = block_idx * br
    inv = inv_ref[0]                                     # radius already folded in

    def body(mask_tail):
        sr = sr_ref[...].astype(jnp.float32)
        hr = hr_ref[...].astype(jnp.float32)
        ra = ra_ref[...].astype(jnp.float32)
        nz = nz_ref[...].astype(jnp.float32)
        z = ra * inv + (nz * sigma if sigma != 1.0 else nz)
        diff = jnp.abs(hr - (sr + z))
        if mask_tail:
            # Only rows past the physical slab end are garbage (padding inside the
            # slab is zero-filled and contributes 0 -> mask against valid_rows only).
            row_ids = jax.lax.broadcasted_iota(jnp.int32, (br, LANES), 0) + row_off
            diff = jnp.where(row_ids < valid_rows, diff, 0.0)
        acc_ref[...] += diff                             # independent per-row vadds

    if not has_partial and not has_oob:
        body(False)                                      # interior-only fast path
    else:
        pl.when(row_off + br <= valid_rows)(lambda: body(False))
        if has_partial:
            pl.when(jnp.logical_and(row_off < valid_rows,
                                    row_off + br > valid_rows))(lambda: body(True))
        # blocks with row_off >= valid_rows are clamped duplicates: skip entirely.

    @pl.when(i == pl.num_programs(1) - 1)
    def _finalize():
        # Single sublane fold (br,128) -> (8,128) in the epilogue, off the hot loop.
        o_ref[...] = acc_ref[...].reshape(br // SUBLANES, SUBLANES, LANES).sum(axis=0)[None]


# ---------------------------------------------------------------------------
# Wrapper
# ---------------------------------------------------------------------------
@functools.partial(jax.jit, static_argnames=("radius", "sigma", "small_path", "block_rows"))
def modif_posterior_loss(sr, hr, coef, random_angle, noise, *,
                         radius=1.0, sigma=1.0, small_path=None, block_rows=None):
    n = sr.size
    row_mult = max(_sublane_multiple(x.dtype) for x in (sr, hr, random_angle, noise))

    sr2d = _to_slab(sr, row_mult)
    hr2d = _to_slab(hr, row_mult)
    ra2d = _to_slab(random_angle, row_mult)
    nz2d = _to_slab(noise, row_mult)
    slab_rows = sr2d.shape[0]

    slab_bytes = sum(x.size * jnp.dtype(x.dtype).itemsize for x in (sr2d, hr2d, ra2d, nz2d))
    use_small = small_path if small_path is not None else (slab_bytes <= SMALL_PATH_MAX_BYTES)

    if use_small:
        partials = pl.pallas_call(
            functools.partial(_fused_small_kernel,
                              radius=float(radius), sigma=float(sigma)),
            out_shape=jax.ShapeDtypeStruct((SUBLANES, LANES), jnp.float32),
        )(sr2d, hr2d, ra2d, nz2d)
    else:
        br = int(block_rows) if block_rows is not None else min(BR_MAX, slab_rows)
        assert br % row_mult == 0 and br > 0, (br, row_mult)
        total_blocks = -(-slab_rows // br)
        ncores = min(_num_tensorcores(), total_blocks)
        blocks_per_core = -(-total_blocks // ncores)
        has_partial = total_blocks * br != slab_rows          # ragged boundary block
        has_oob = blocks_per_core * ncores != total_blocks    # clamped dummy blocks

        # Global sum(ra^2) in plain XLA (single fused reduce pass); fold radius in.
        sumsq = jnp.sum(jnp.square(random_angle.astype(jnp.float32)))
        inv_arr = (radius / jnp.sqrt(sumsq)).reshape(1).astype(jnp.float32)

        def tile_map(c, i, inv):
            idx = c * blocks_per_core + i
            return (jnp.minimum(idx, total_blocks - 1), 0)    # clamp; kernel skips dummies

        def out_map(c, i, inv):
            return (c, 0, 0)

        tile_spec = pl.BlockSpec((br, LANES), tile_map)

        if ncores > 1:
            dim_sem = (pltpu.CORE_PARALLEL, pltpu.ARBITRARY)  # real 2-TC split on v7x
        else:
            dim_sem = (pltpu.ARBITRARY, pltpu.ARBITRARY)

        kernel = functools.partial(
            _l1_tiled_kernel, br=br, valid_rows=slab_rows,
            blocks_per_core=blocks_per_core, sigma=float(sigma),
            has_partial=has_partial, has_oob=has_oob)

        partials = pl.pallas_call(
            kernel,
            out_shape=jax.ShapeDtypeStruct((ncores, SUBLANES, LANES), jnp.float32),
            grid_spec=pltpu.PrefetchScalarGridSpec(
                num_scalar_prefetch=1,
                grid=(ncores, blocks_per_core),
                in_specs=[tile_spec, tile_spec, tile_spec, tile_spec],
                out_specs=pl.BlockSpec((1, SUBLANES, LANES), out_map),
                scratch_shapes=[pltpu.VMEM((br, LANES), jnp.float32)],
            ),
            compiler_params=pltpu.CompilerParams(
                dimension_semantics=dim_sem,
                vmem_limit_bytes=32 * 1024 * 1024,
            ),
        )(inv_arr, sr2d, hr2d, ra2d, nz2d)

    loss = jnp.sum(partials) / jnp.float32(n)                  # F.l1_loss reduction='mean'
    # TODO(synk): loss_logger.cache_in(...) is host-side logging; no kernel equivalent.
    return coef * loss


def _reference(sr, hr, coef, random_angle, noise, radius=1.0, sigma=1.0):
    sr, hr, ra, nz = (a.astype(jnp.float32) for a in (sr, hr, random_angle, noise))
    rna = ra / jnp.sqrt(jnp.sum(ra ** 2))
    z_prime = radius * rna + nz * sigma
    return coef * jnp.mean(jnp.abs(hr - (sr + z_prime)))


if __name__ == "__main__":
    key = jax.random.PRNGKey(0)
    ks = jax.random.split(key, 8)
    coef = jnp.float32(0.5)

    # Case 1: small SR-loss shape -> fully fused single-block VMEM kernel.
    shape = (2, 4, 16, 16)
    sr = jax.random.normal(ks[0], shape, dtype=jnp.float32)
    hr = jax.random.normal(ks[1], shape, dtype=jnp.float32)
    ra = jax.random.normal(ks[2], shape, dtype=jnp.float32)   # module draws these fresh each
    nz = jax.random.normal(ks[3], shape, dtype=jnp.float32)   # forward; drawn here for parity

    out1 = jax.block_until_ready(modif_posterior_loss(sr, hr, coef, ra, nz))
    ref1 = _reference(sr, hr, coef, ra, nz)
    assert jnp.allclose(out1, ref1, rtol=1e-5, atol=1e-6), (out1, ref1)

    # Case 2: same data forced through the tiled streaming path.
    out2 = jax.block_until_ready(
        modif_posterior_loss(sr, hr, coef, ra, nz, small_path=False))
    assert jnp.allclose(out2, ref1, rtol=1e-5, atol=1e-6), (out2, ref1)

    # Case 3: ragged shape + multi-block grid (padded slab + boundary-block mask path).
    shape3 = (3, 5, 23, 17)
    sr3 = jax.random.normal(ks[4], shape3, dtype=jnp.float32)
    hr3 = jax.random.normal(ks[5], shape3, dtype=jnp.float32)
    ra3 = jax.random.normal(ks[6], shape3, dtype=jnp.float32)
    nz3 = jax.random.normal(ks[7], shape3, dtype=jnp.float32)
    out3 = jax.block_until_ready(
        modif_posterior_loss(sr3, hr3, coef, ra3, nz3, small_path=False, block_rows=32))
    ref3 = _reference(sr3, hr3, coef, ra3, nz3)
    assert jnp.allclose(out3, ref3, rtol=1e-5, atol=1e-6), (out3, ref3)

    print("KERNEL_OK")
</pallas_src>

<mosaic_0001>
module attributes {stable_mosaic.version = 11 : i64} {
  func.func @_fused_small_kernel(%arg0: memref<16x128xf32, #tpu.memory_space<vmem>>, %arg1: memref<16x128xf32, #tpu.memory_space<vmem>>, %arg2: memref<16x128xf32, #tpu.memory_space<vmem>>, %arg3: memref<16x128xf32, #tpu.memory_space<vmem>>, %arg4: memref<8x128xf32, #tpu.memory_space<vmem>>) attributes {dimension_semantics = [], scalar_prefetch = 0 : i64, scratch_operands = 0 : i64, tpu.core_type = #tpu.core_type<tc>} {
    %c0 = arith.constant 0 : index
    %c0_0 = arith.constant 0 : index
    %0 = vector.load %arg0[%c0, %c0_0] : memref<16x128xf32, #tpu.memory_space<vmem>>, vector<16x128xf32>
    %c0_1 = arith.constant 0 : index
    %c0_2 = arith.constant 0 : index
    %1 = vector.load %arg1[%c0_1, %c0_2] : memref<16x128xf32, #tpu.memory_space<vmem>>, vector<16x128xf32>
    %c0_3 = arith.constant 0 : index
    %c0_4 = arith.constant 0 : index
    %2 = vector.load %arg2[%c0_3, %c0_4] : memref<16x128xf32, #tpu.memory_space<vmem>>, vector<16x128xf32>
    %c0_5 = arith.constant 0 : index
    %c0_6 = arith.constant 0 : index
    %3 = vector.load %arg3[%c0_5, %c0_6] : memref<16x128xf32, #tpu.memory_space<vmem>>, vector<16x128xf32>
    %4 = arith.mulf %2, %2 : vector<16x128xf32>
    %5 = vector.shape_cast %4 : vector<16x128xf32> to vector<1x16x128xf32>
    %cst = arith.constant dense<0.000000e+00> : vector<1xf32>
    %6 = vector.multi_reduction <add>, %5, %cst [1, 2] : vector<1x16x128xf32> to vector<1xf32>
    %7 = vector.shape_cast %6 : vector<1xf32> to vector<1x1x1xf32>
    %8 = vector.extract %7[0, 0, 0] : f32 from vector<1x1x1xf32>
    %9 = math.sqrt %8 : f32
    %cst_7 = arith.constant 1.000000e+00 : f32
    %10 = arith.divf %cst_7, %9 : f32
    %11 = vector.broadcast %10 : f32 to vector<16x128xf32>
    %12 = arith.mulf %2, %11 : vector<16x128xf32>
    %13 = arith.addf %12, %3 : vector<16x128xf32>
    %14 = arith.addf %0, %13 : vector<16x128xf32>
    %15 = arith.subf %1, %14 : vector<16x128xf32>
    %16 = math.absf %15 : vector<16x128xf32>
    %17 = vector.shape_cast %16 : vector<16x128xf32> to vector<2x8x128xf32>
    %cst_8 = arith.constant dense<0.000000e+00> : vector<8x128xf32>
    %18 = vector.multi_reduction <add>, %17, %cst_8 [0] : vector<2x8x128xf32> to vector<8x128xf32>
    %c0_9 = arith.constant 0 : index
    %c0_10 = arith.constant 0 : index
    %19 = vector.load %arg4[%c0_9, %c0_10] : memref<8x128xf32, #tpu.memory_space<vmem>>, vector<8x128xf32>
    tpu.vector_store %arg4[%c0_9, %c0_10], %18 {strides = array<i32>} : memref<8x128xf32, #tpu.memory_space<vmem>>, vector<8x128xf32>,
    return
  }
}

</mosaic_0001>

<llo_original>
// kernel: modif_posterior_loss.1
$region0: #{modif_posterior_loss.1}
  #allocation0 [shape = 'u32[]', space=smem, size = 0x4, offset = 0x4, fixed_abs, tag = 'smem constant byte address 0x4 - core index']
  #allocation1 [shape = 'u32[144,128]{1,0:T(1,128)}', space=vmem, size = 0x12000, scoped, tag = 'internal scratch']
  %s0 = inlined_call_operand.vmem [shape: f32[16,128], index: 0, kind: input, shape index: {}]
  %s1 = inlined_call_operand.vmem [shape: f32[16,128], index: 1, kind: input, shape index: {}]
  %s2 = inlined_call_operand.vmem [shape: f32[16,128], index: 2, kind: input, shape index: {}]
  %s3 = inlined_call_operand.vmem [shape: f32[16,128], index: 3, kind: input, shape index: {}]
  %s4 = inlined_call_operand.vmem [shape: f32[8,128], index: 4, kind: output, shape index: {}]
  %s5 = sld [smem:[#allocation0]]
  $region26: #{modif_posterior_loss.1} parent=0
    _
  %s7 = ssub.s32 1, %s5
  %s8 = scalar_select 0, %s7, %s5
  // Predicated region
  $region2: #{modif_posterior_loss.1} parent=0 // pred_check
    _
  $region3: #{modif_posterior_loss.1} parent=0 // pred_check_branch
    %10 = sbr.rel (0) target = $region5
  $region4: #{modif_posterior_loss.1} parent=0 // pred_region
    _
  $region5: #{modif_posterior_loss.1} parent=0 // pred_fallthru
    _
  // Predicated region
  $region6: #{modif_posterior_loss.1} parent=0 // pred_check
    _
  $region7: #{modif_posterior_loss.1} parent=0 // pred_check_branch
    %12 = sbr.rel (0) target = $region9
  $region8: #{modif_posterior_loss.1} parent=0 // pred_region
    _
  $region9: #{modif_posterior_loss.1} parent=0 // pred_fallthru
    _
  // Predicated region
  $region10: #{modif_posterior_loss.1} parent=0 // pred_check
    _
  $region11: #{modif_posterior_loss.1} parent=0 // pred_check_branch
    %14 = sbr.rel (0) target = $region13
  $region12: #{modif_posterior_loss.1} parent=0 // pred_region
    _
  $region13: #{modif_posterior_loss.1} parent=0 // pred_fallthru
    _
  // Predicated region
  $region14: #{modif_posterior_loss.1} parent=0 // pred_check
    _
  $region15: #{modif_posterior_loss.1} parent=0 // pred_check_branch
    %16 = sbr.rel (0) target = $region17
  $region16: #{modif_posterior_loss.1} parent=0 // pred_region
    _
  $region17: #{modif_posterior_loss.1} parent=0 // pred_fallthru
    _
  %v17 = vld [vmem:[%s0] sm:$0xff]
  %v18 = vld [vmem:[%s0 + $0x8] sm:$0xff]
  %v19 = vld [vmem:[%s1] sm:$0xff]
  %v20 = vld [vmem:[%s1 + $0x8] sm:$0xff]
  %v21 = vld [vmem:[%s2] sm:$0xff]
  %v22 = vld [vmem:[%s2 + $0x8] sm:$0xff]
  %v23 = vld [vmem:[%s3] sm:$0xff]
  %v24 = vld [vmem:[%s3 + $0x8] sm:$0xff]
  %v25 = vmul.f32 %v21, %v21
  %v26 = vmul.f32 %v22, %v22
  %v27 = vadd.f32 %v25, %v26
  %28 = vadd.xlane.f32.xlu0 %v27
  %v29 = vpop.xlane.xlu0 %28
  %v30 = vrot.slane %v29, 4
  %v31 = vadd.f32 %v29, %v30
  %v32 = vrot.slane %v31, 2
  %v33 = vadd.f32 %v31, %v32
  %v34 = vrot.slane %v33, 1
  %v35 = vadd.f32 %v33, %v34
  %s36 = vtos %v35
  %v37 = vstv %s36
  %v38 = vrsqrt.pop %v37
  %v39 = vmul.f32 %v37, %v38
  %vm40 = vcmp.eq.f32.partialorder %v37, inf
  %v41 = vsel %vm40, %v37, %v39
  %vm42 = vcmp.eq.f32.partialorder %v37, 0.0
  %v43 = vand.u32 %v37, 2147483648
  %v44 = vsel %vm42, %v43, %v41
  %s45 = vtos %v44
  %v46 = vstv %s45
  %v47 = vrcp.pop %v46
  %s48 = vtos %v47
  %v49 = vstv %s48
  %v50 = vmul.f32 %v21, %v49
  %v51 = vmul.f32 %v22, %v49
  %v52 = vadd.f32 %v50, %v23
  %v53 = vadd.f32 %v51, %v24
  %v54 = vadd.f32 %v17, %v52
  %v55 = vadd.f32 %v18, %v53
  %v56 = vsub.f32 %v19, %v54
  %v57 = vsub.f32 %v20, %v55
  %v58 = vand.u32 2147483647, %v56
  %v59 = vand.u32 2147483647, %v57
  %v60 = vadd.f32 %v58, %v59
  %61 = vst [vmem:[%s4] sm:$0xff] %v60
  // Predicated region
  $region18: #{modif_posterior_loss.1} parent=0 // pred_check
    _
  $region19: #{modif_posterior_loss.1} parent=0 // pred_check_branch
    %63 = sbr.rel (0) target = $region21
  $region20: #{modif_posterior_loss.1} parent=0 // pred_region
    _
  $region21: #{modif_posterior_loss.1} parent=0 // pred_fallthru
    _
  // Predicated region
  $region22: #{modif_posterior_loss.1} parent=0 // pred_check
    _
  $region23: #{modif_posterior_loss.1} parent=0 // pred_check_branch
    %65 = sbr.rel (0) target = $region25
  $region24: #{modif_posterior_loss.1} parent=0 // pred_region
    _
  $region25: #{modif_posterior_loss.1} parent=0 // pred_fallthru
    _

</llo_original>
